<compile_context>
chip_gen: v6e
topology: v6e:2x2x1
jax: 0.10.0
libtpu: 0.0.40
codegen_flags: <defaults>
</compile_context>

<pallas_src>
import jax
import jax.numpy as jnp
from jax.experimental import pallas as pl
from jax.experimental.pallas import tpu as pltpu

_LANE = 128


def _round_up(x, m):
    return (x + m - 1) // m * m


def mlp_kernel(x_ref, w1_ref, b1_ref, w2_ref, b2_ref, o_ref):
    # fc1 on the MXU, f32 accumulation regardless of input dtype.
    h = jnp.dot(x_ref[...], w1_ref[...], preferred_element_type=jnp.float32)
    # Bias add + ReLU on the f32 accumulator (VPU work, hidden under the MXU).
    h = jnp.maximum(h + b1_ref[...].astype(jnp.float32), 0.0)
    # fc2: cast the ReLU output to the weight dtype (bf16 fast path) only for the MXU
    # inputs; accumulate in f32, add bias in f32, downcast only at the final store.
    y = jnp.dot(h.astype(w2_ref.dtype), w2_ref[...], preferred_element_type=jnp.float32)
    o_ref[...] = (y + b2_ref[...].astype(jnp.float32)).astype(o_ref.dtype)


def prepare_mlp_params(w1, b1, w2, b2):
    """One-time parameter prep: pad hidden/output dims to lane-dense multiples of 128.

    w1: [in, hid], b1: [hid] or [1, hid], w2: [hid, out], b2: [out] or [1, out].
    Zero padding is numerically inert (relu(0)=0; zero W2 rows/cols contribute 0).
    """
    in_size, hid = w1.shape
    hid2, out_size = w2.shape
    assert hid == hid2, "w1/w2 hidden dims disagree"
    hid_p = _round_up(max(hid, _LANE), _LANE)
    out_p = _round_up(max(out_size, _LANE), _LANE)
    w1_p = jnp.pad(w1, ((0, 0), (0, hid_p - hid)))
    b1_p = jnp.pad(jnp.reshape(b1, (1, hid)), ((0, 0), (0, hid_p - hid)))
    w2_p = jnp.pad(w2, ((0, hid_p - hid), (0, out_p - out_size)))
    b2_p = jnp.pad(jnp.reshape(b2, (1, out_size)), ((0, 0), (0, out_p - out_size)))
    return dict(w1=w1_p, b1=b1_p, w2=w2_p, b2=b2_p,
                in_size=in_size, hid=hid, out_size=out_size)


def _vmem_capacity_bytes():
    try:
        return int(pltpu.get_tpu_info().vmem_capacity_bytes)
    except Exception:
        return 64 * 2 ** 20  # conservative fallback (= v7x per-TC VMEM)


def _plan_tiles(batch, in_size, hid_p, out_p, x_itemsize, w_itemsize,
                resident_bytes, weights_single_buffered):
    """Pick batch tile size tm and a vmem_limit for the kernel."""
    cap = _vmem_capacity_bytes()
    budget = int(0.70 * cap)
    # Default pipelining double-buffers every input; with pl.Buffered(1) the resident
    # weights are allocated once.
    resident = resident_bytes * (1 if weights_single_buffered else 2)

    def tile_bytes(t):
        x_io = 2 * t * in_size * x_itemsize      # double-buffered streamed x tile
        o_io = 2 * t * out_p * x_itemsize        # double-buffered streamed out tile
        h_f32 = t * hid_p * 4                    # fc1 f32 accumulator
        h_cast = t * hid_p * w_itemsize          # h cast to weight dtype for fc2
        y_f32 = t * out_p * 4                    # fc2 f32 accumulator
        return int(1.2 * (x_io + o_io + h_f32 + h_cast + y_f32))  # 20% safety factor

    sublane_pack = 8 * max(1, 4 // x_itemsize)   # 8 (f32) / 16 (bf16) / 32 (int8)
    candidates = [t for t in (1024, 512, 256, 128, 64, 32, 16, 8) if t >= sublane_pack]
    fits = [t for t in candidates if resident + tile_bytes(t) <= budget]
    if not fits:
        # TODO(synk): stream W1/W2 over a hidden-dim grid axis (accumulator pattern)
        # instead of requiring the weights to stay VMEM-resident.
        raise ValueError(
            f"MLP weights ({resident} bytes incl. buffering) do not fit the VMEM "
            f"budget ({budget} bytes); hidden-dim streaming is not implemented.")

    def score(t):
        b_pad = _round_up(batch, t)
        waste = b_pad - batch                    # zero rows computed then discarded
        steps = b_pad // t                       # >=2 steps lets v7x use both TCs
        return (waste, t < _LANE, -min(steps, 4), -t)

    tm = min(fits, key=score)
    need = resident + tile_bytes(tm)
    vmem_limit = int(min(0.9 * cap, max(1.5 * need, 32 * 2 ** 20)))
    return tm, vmem_limit


def _mlp_pallas_call(x_p, params, *, tm, vmem_limit, single_buffer_weights):
    b_p, in_size = x_p.shape
    hid_p = params["w1"].shape[1]
    out_p = params["w2"].shape[1]
    grid = (b_p // tm,)

    # Constant-index operands: single buffer (no point double-buffering weights that
    # never change block).  Empty kwargs -> default pipelining on the fallback path.
    weight_kw = {"pipeline_mode": pl.Buffered(1)} if single_buffer_weights else {}

    x_bytes = jnp.dtype(x_p.dtype).itemsize
    flops = 2 * b_p * (in_size * hid_p + hid_p * out_p)
    bytes_accessed = int(
        x_p.size * x_bytes
        + sum(params[k].size * jnp.dtype(params[k].dtype).itemsize
              for k in ("w1", "b1", "w2", "b2"))
        + b_p * out_p * x_bytes)

    return pl.pallas_call(
        mlp_kernel,
        out_shape=jax.ShapeDtypeStruct((b_p, out_p), x_p.dtype),
        grid=grid,
        in_specs=[
            pl.BlockSpec((tm, in_size), lambda i: (i, 0)),                   # x streams
            pl.BlockSpec((in_size, hid_p), lambda i: (0, 0), **weight_kw),   # W1 resident
            pl.BlockSpec((1, hid_p), lambda i: (0, 0), **weight_kw),         # b1 resident
            pl.BlockSpec((hid_p, out_p), lambda i: (0, 0), **weight_kw),     # W2 resident
            pl.BlockSpec((1, out_p), lambda i: (0, 0), **weight_kw),         # b2 resident
        ],
        out_specs=pl.BlockSpec((tm, out_p), lambda i: (i, 0)),
        compiler_params=pltpu.CompilerParams(
            dimension_semantics=("parallel",),
            vmem_limit_bytes=vmem_limit,
        ),
        cost_estimate=pl.CostEstimate(
            flops=flops, transcendentals=0, bytes_accessed=bytes_accessed),
    )(x_p, params["w1"], params["b1"], params["w2"], params["b2"])


# Flipped to False (once) if this JAX build rejects pipeline_mode=pl.Buffered(1).
_SINGLE_BUFFERED_WEIGHTS_OK = [True]


def mlp_forward_prepared(x, params):
    """x: [batch, input_size]; params from prepare_mlp_params (padded, reusable)."""
    B, in_size = x.shape
    assert in_size == params["in_size"]
    hid_p = params["w1"].shape[1]
    out_p = params["w2"].shape[1]
    x_itemsize = jnp.dtype(x.dtype).itemsize
    w_itemsize = jnp.dtype(params["w1"].dtype).itemsize
    resident_bytes = sum(params[k].size for k in ("w1", "b1", "w2", "b2")) * w_itemsize

    def run(single_buffer):
        tm, vmem_limit = _plan_tiles(B, in_size, hid_p, out_p, x_itemsize, w_itemsize,
                                     resident_bytes, single_buffer)
        b_p = _round_up(B, tm)
        x_p = jnp.pad(x, ((0, b_p - B), (0, 0))) if b_p != B else x
        out_padded = _mlp_pallas_call(x_p, params, tm=tm, vmem_limit=vmem_limit,
                                      single_buffer_weights=single_buffer)
        return out_padded[:B, :params["out_size"]]

    if _SINGLE_BUFFERED_WEIGHTS_OK[0]:
        try:
            return run(True)
        except Exception:
            # pipeline_mode not supported by this JAX build: fall back to default
            # double-buffered weights (budget math already accounts 2x for them).
            _SINGLE_BUFFERED_WEIGHTS_OK[0] = False
    return run(False)


def mlp_forward(x, w1, b1, w2, b2):
    """Convenience wrapper. Prefer prepare_mlp_params() once + mlp_forward_prepared()."""
    return mlp_forward_prepared(x, prepare_mlp_params(w1, b1, w2, b2))


def init_mlp_params(key, input_size, hidden_size, output_size, dtype=jnp.float32):
    """Deterministic init mimicking torch.nn.Linear (uniform(-1/sqrt(fan_in), +)).
    Weights are stored as [in_features, out_features] (transpose of PyTorch layout)."""
    k1, k2, k3, k4 = jax.random.split(key, 4)
    bound1 = 1.0 / (input_size ** 0.5)
    bound2 = 1.0 / (hidden_size ** 0.5)
    w1 = jax.random.uniform(k1, (input_size, hidden_size), dtype, -bound1, bound1)
    b1 = jax.random.uniform(k2, (1, hidden_size), dtype, -bound1, bound1)
    w2 = jax.random.uniform(k3, (hidden_size, output_size), dtype, -bound2, bound2)
    b2 = jax.random.uniform(k4, (1, output_size), dtype, -bound2, bound2)
    return w1, b1, w2, b2


if __name__ == "__main__":
    # Small shapes consistent with the module's forward: x: [batch, input_size].
    batch, input_size, hidden_size, output_size = 8, 32, 64, 16

    key = jax.random.PRNGKey(0)
    kx, kp = jax.random.split(key)
    x = jax.random.normal(kx, (batch, input_size), dtype=jnp.float32)
    w1, b1, w2, b2 = init_mlp_params(kp, input_size, hidden_size, output_size)

    # Pure-JAX reference (same semantics as the PyTorch forward).
    ref = jnp.maximum(x @ w1 + b1, 0.0) @ w2 + b2

    # f32 path: params padded once, reused across calls; tight tolerance.
    params = prepare_mlp_params(w1, b1, w2, b2)
    out = jax.block_until_ready(mlp_forward_prepared(x, params))
    assert out.shape == (batch, output_size)
    assert jnp.allclose(out, ref, atol=1e-5, rtol=1e-5)

    # bf16 fast path (MXU-friendly inputs/weights, f32 accumulation inside the kernel).
    bf = lambda a: a.astype(jnp.bfloat16)
    params_bf = prepare_mlp_params(bf(w1), bf(b1), bf(w2), bf(b2))
    out_bf = jax.block_until_ready(mlp_forward_prepared(bf(x), params_bf))
    assert out_bf.shape == (batch, output_size)
    assert jnp.allclose(out_bf.astype(jnp.float32), ref, atol=5e-2, rtol=5e-2)

    print("KERNEL_OK")
</pallas_src>

<mosaic_0001>
module attributes {stable_mosaic.version = 11 : i64} {
  func.func @mlp_kernel(%arg0: i32, %arg1: memref<8x32xf32, #tpu.memory_space<vmem>>, %arg2: memref<32x128xf32, #tpu.memory_space<vmem>>, %arg3: memref<1x128xf32, #tpu.memory_space<vmem>>, %arg4: memref<128x128xf32, #tpu.memory_space<vmem>>, %arg5: memref<1x128xf32, #tpu.memory_space<vmem>>, %arg6: memref<8x128xf32, #tpu.memory_space<vmem>>) attributes {dimension_semantics = [#tpu.dimension_semantics<parallel>], iteration_bounds = array<i64: 1>, scalar_prefetch = 0 : i64, scratch_operands = 0 : i64, tpu.core_type = #tpu.core_type<tc>, window_params = [{transform_indices = @transform_0, window_bounds = array<i64: 8, 32>}, {pipeline_mode = #tpu.pipeline_mode<synchronous>, transform_indices = @transform_1, window_bounds = array<i64: 32, 128>}, {pipeline_mode = #tpu.pipeline_mode<synchronous>, transform_indices = @transform_2, window_bounds = array<i64: 1, 128>}, {pipeline_mode = #tpu.pipeline_mode<synchronous>, transform_indices = @transform_3, window_bounds = array<i64: 128, 128>}, {pipeline_mode = #tpu.pipeline_mode<synchronous>, transform_indices = @transform_4, window_bounds = array<i64: 1, 128>}, {transform_indices = @transform_5, window_bounds = array<i64: 8, 128>}]} {
    %c0 = arith.constant 0 : index
    %c0_0 = arith.constant 0 : index
    %0 = vector.load %arg1[%c0, %c0_0] : memref<8x32xf32, #tpu.memory_space<vmem>>, vector<8x32xf32>
    %c0_1 = arith.constant 0 : index
    %c0_2 = arith.constant 0 : index
    %1 = vector.load %arg2[%c0_1, %c0_2] : memref<32x128xf32, #tpu.memory_space<vmem>>, vector<32x128xf32>
    %cst = arith.constant dense<0.000000e+00> : vector<8x128xf32>
    %2 = tpu.matmul %0, %1, %cst {dimension_numbers = #tpu.dot_dimension_numbers<[1], [0], [0], [1], [0, 0, 1, 1], [], []>} : vector<8x32xf32>, vector<32x128xf32>, vector<8x128xf32> -> vector<8x128xf32>
    %c0_3 = arith.constant 0 : index
    %c0_4 = arith.constant 0 : index
    %3 = vector.load %arg3[%c0_3, %c0_4] : memref<1x128xf32, #tpu.memory_space<vmem>>, vector<1x128xf32>
    %4 = vector.broadcast %3 : vector<1x128xf32> to vector<8x128xf32>
    %5 = arith.addf %2, %4 : vector<8x128xf32>
    %cst_5 = arith.constant 0.000000e+00 : f32
    %6 = vector.broadcast %cst_5 : f32 to vector<8x128xf32>
    %7 = arith.maximumf %5, %6 : vector<8x128xf32>
    %c0_6 = arith.constant 0 : index
    %c0_7 = arith.constant 0 : index
    %8 = vector.load %arg4[%c0_6, %c0_7] : memref<128x128xf32, #tpu.memory_space<vmem>>, vector<128x128xf32>
    %cst_8 = arith.constant dense<0.000000e+00> : vector<8x128xf32>
    %9 = tpu.matmul %7, %8, %cst_8 {dimension_numbers = #tpu.dot_dimension_numbers<[1], [0], [0], [1], [0, 0, 1, 1], [], []>} : vector<8x128xf32>, vector<128x128xf32>, vector<8x128xf32> -> vector<8x128xf32>
    %c0_9 = arith.constant 0 : index
    %c0_10 = arith.constant 0 : index
    %10 = vector.load %arg5[%c0_9, %c0_10] : memref<1x128xf32, #tpu.memory_space<vmem>>, vector<1x128xf32>
    %11 = vector.broadcast %10 : vector<1x128xf32> to vector<8x128xf32>
    %12 = arith.addf %9, %11 : vector<8x128xf32>
    %c0_11 = arith.constant 0 : index
    %c0_12 = arith.constant 0 : index
    %13 = vector.load %arg6[%c0_11, %c0_12] : memref<8x128xf32, #tpu.memory_space<vmem>>, vector<8x128xf32>
    tpu.vector_store %arg6[%c0_11, %c0_12], %12 {strides = array<i32>} : memref<8x128xf32, #tpu.memory_space<vmem>>, vector<8x128xf32>,
    return
  }
  func.func @transform_0(%arg0: i32) -> (i32, i32) {
    %c0_i32 = arith.constant 0 : i32
    %c0_i32_0 = arith.constant 0 : i32
    return %arg0, %c0_i32 : i32, i32
  }
  func.func @transform_1(%arg0: i32) -> (i32, i32) {
    %c0_i32 = arith.constant 0 : i32
    %c0_i32_0 = arith.constant 0 : i32
    %c0_i32_1 = arith.constant 0 : i32
    return %c0_i32, %c0_i32_0 : i32, i32
  }
  func.func @transform_2(%arg0: i32) -> (i32, i32) {
    %c0_i32 = arith.constant 0 : i32
    %c0_i32_0 = arith.constant 0 : i32
    %c0_i32_1 = arith.constant 0 : i32
    return %c0_i32, %c0_i32_0 : i32, i32
  }
  func.func @transform_3(%arg0: i32) -> (i32, i32) {
    %c0_i32 = arith.constant 0 : i32
    %c0_i32_0 = arith.constant 0 : i32
    %c0_i32_1 = arith.constant 0 : i32
    return %c0_i32, %c0_i32_0 : i32, i32
  }
  func.func @transform_4(%arg0: i32) -> (i32, i32) {
    %c0_i32 = arith.constant 0 : i32
    %c0_i32_0 = arith.constant 0 : i32
    %c0_i32_1 = arith.constant 0 : i32
    return %c0_i32, %c0_i32_0 : i32, i32
  }
  func.func @transform_5(%arg0: i32) -> (i32, i32) {
    %c0_i32 = arith.constant 0 : i32
    %c0_i32_0 = arith.constant 0 : i32
    return %arg0, %c0_i32 : i32, i32
  }
}

module attributes {stable_mosaic.version = 11 : i64} {
  func.func @mlp_kernel(%arg0: i32, %arg1: memref<8x32xf32, #tpu.memory_space<vmem>>, %arg2: memref<32x128xf32, #tpu.memory_space<vmem>>, %arg3: memref<1x128xf32, #tpu.memory_space<vmem>>, %arg4: memref<128x128xf32, #tpu.memory_space<vmem>>, %arg5: memref<1x128xf32, #tpu.memory_space<vmem>>, %arg6: memref<8x128xf32, #tpu.memory_space<vmem>>) attributes {dimension_semantics = [#tpu.dimension_semantics<parallel>], iteration_bounds = array<i64: 1>, scalar_prefetch = 0 : i64, scratch_operands = 0 : i64, tpu.core_type = #tpu.core_type<tc>, window_params = [{transform_indices = @transform_0, window_bounds = array<i64: 8, 32>}, {pipeline_mode = #tpu.pipeline_mode<synchronous>, transform_indices = @transform_1, window_bounds = array<i64: 32, 128>}, {pipeline_mode = #tpu.pipeline_mode<synchronous>, transform_indices = @transform_2, window_bounds = array<i64: 1, 128>}, {pipeline_mode = #tpu.pipeline_mode<synchronous>, transform_indices = @transform_3, window_bounds = array<i64: 128, 128>}, {pipeline_mode = #tpu.pipeline_mode<synchronous>, transform_indices = @transform_4, window_bounds = array<i64: 1, 128>}, {transform_indices = @transform_5, window_bounds = array<i64: 8, 128>}]} {
    %c0 = arith.constant 0 : index
    %c0_0 = arith.constant 0 : index
    %0 = vector.load %arg1[%c0, %c0_0] : memref<8x32xf32, #tpu.memory_space<vmem>>, vector<8x32xf32>
    %c0_1 = arith.constant 0 : index
    %c0_2 = arith.constant 0 : index
    %1 = vector.load %arg2[%c0_1, %c0_2] : memref<32x128xf32, #tpu.memory_space<vmem>>, vector<32x128xf32>
    %cst = arith.constant dense<0.000000e+00> : vector<8x128xf32>
    %2 = tpu.matmul %0, %1, %cst {dimension_numbers = #tpu.dot_dimension_numbers<[1], [0], [0], [1], [0, 0, 1, 1], [], []>} : vector<8x32xf32>, vector<32x128xf32>, vector<8x128xf32> -> vector<8x128xf32>
    %c0_3 = arith.constant 0 : index
    %c0_4 = arith.constant 0 : index
    %3 = vector.load %arg3[%c0_3, %c0_4] : memref<1x128xf32, #tpu.memory_space<vmem>>, vector<1x128xf32>
    %4 = vector.broadcast %3 : vector<1x128xf32> to vector<8x128xf32>
    %5 = arith.addf %2, %4 : vector<8x128xf32>
    %cst_5 = arith.constant 0.000000e+00 : f32
    %6 = vector.broadcast %cst_5 : f32 to vector<8x128xf32>
    %7 = arith.maximumf %5, %6 : vector<8x128xf32>
    %c0_6 = arith.constant 0 : index
    %c0_7 = arith.constant 0 : index
    %8 = vector.load %arg4[%c0_6, %c0_7] : memref<128x128xf32, #tpu.memory_space<vmem>>, vector<128x128xf32>
    %cst_8 = arith.constant dense<0.000000e+00> : vector<8x128xf32>
    %9 = tpu.matmul %7, %8, %cst_8 {dimension_numbers = #tpu.dot_dimension_numbers<[1], [0], [0], [1], [0, 0, 1, 1], [], []>} : vector<8x128xf32>, vector<128x128xf32>, vector<8x128xf32> -> vector<8x128xf32>
    %c0_9 = arith.constant 0 : index
    %c0_10 = arith.constant 0 : index
    %10 = vector.load %arg5[%c0_9, %c0_10] : memref<1x128xf32, #tpu.memory_space<vmem>>, vector<1x128xf32>
    %11 = vector.broadcast %10 : vector<1x128xf32> to vector<8x128xf32>
    %12 = arith.addf %9, %11 : vector<8x128xf32>
    %c0_11 = arith.constant 0 : index
    %c0_12 = arith.constant 0 : index
    %13 = vector.load %arg6[%c0_11, %c0_12] : memref<8x128xf32, #tpu.memory_space<vmem>>, vector<8x128xf32>
    tpu.vector_store %arg6[%c0_11, %c0_12], %12 {strides = array<i32>} : memref<8x128xf32, #tpu.memory_space<vmem>>, vector<8x128xf32>,
    return
  }
  func.func @transform_0(%arg0: i32) -> (i32, i32) {
    %c0_i32 = arith.constant 0 : i32
    %c0_i32_0 = arith.constant 0 : i32
    return %arg0, %c0_i32 : i32, i32
  }
  func.func @transform_1(%arg0: i32) -> (i32, i32) {
    %c0_i32 = arith.constant 0 : i32
    %c0_i32_0 = arith.constant 0 : i32
    %c0_i32_1 = arith.constant 0 : i32
    return %c0_i32, %c0_i32_0 : i32, i32
  }
  func.func @transform_2(%arg0: i32) -> (i32, i32) {
    %c0_i32 = arith.constant 0 : i32
    %c0_i32_0 = arith.constant 0 : i32
    %c0_i32_1 = arith.constant 0 : i32
    return %c0_i32, %c0_i32_0 : i32, i32
  }
  func.func @transform_3(%arg0: i32) -> (i32, i32) {
    %c0_i32 = arith.constant 0 : i32
    %c0_i32_0 = arith.constant 0 : i32
    %c0_i32_1 = arith.constant 0 : i32
    return %c0_i32, %c0_i32_0 : i32, i32
  }
  func.func @transform_4(%arg0: i32) -> (i32, i32) {
    %c0_i32 = arith.constant 0 : i32
    %c0_i32_0 = arith.constant 0 : i32
    %c0_i32_1 = arith.constant 0 : i32
    return %c0_i32, %c0_i32_0 : i32, i32
  }
  func.func @transform_5(%arg0: i32) -> (i32, i32) {
    %c0_i32 = arith.constant 0 : i32
    %c0_i32_0 = arith.constant 0 : i32
    return %arg0, %c0_i32 : i32, i32
  }
}

</mosaic_0001>

<llo_original>
// kernel: tpu_custom_call.1
$region0: #{tpu_custom_call.1}
  #allocation0 [shape = 'u32[]', space=smem, size = 0x4, offset = 0x4, fixed_abs, tag = 'smem constant byte address 0x4 - core index']
  #allocation1 [shape = 'u32[144,128]{1,0:T(1,128)}', space=vmem, size = 0x12000, scoped, tag = 'internal scratch']
  %s0 = inlined_call_operand.hbm [shape: f32[8,32], index: 0, kind: input, shape index: {}]
  %s1 = inlined_call_operand.hbm [shape: f32[32,128], index: 1, kind: input, shape index: {}]
  %s2 = inlined_call_operand.vmem [shape: f32[1,128], index: 2, kind: input, shape index: {}]
  %s3 = inlined_call_operand.hbm [shape: f32[128,128], index: 3, kind: input, shape index: {}]
  %s4 = inlined_call_operand.vmem [shape: f32[1,128], index: 4, kind: input, shape index: {}]
  %s5 = inlined_call_operand.hbm [shape: f32[8,128], index: 5, kind: output, shape index: {}]
  %s6 = sld [smem:[#allocation0]]
  $region42: #{tpu_custom_call.1} parent=0
    _
  %s8 = ssub.s32 1, %s6
  %s9 = scalar_select 0, %s8, %s6
  $region1: #{tpu_custom_call.1} parent=0
    #allocation2 [shape = 'u8[4096]{0}', space=vmem, size = 0x1000, scoped, tag = 'input window, operand 0, single buffered']
    #allocation3 [shape = 's32[1]{0}', space=sflag, size = 0x4, scoped, tag = 'scoped memory for tpu_custom_call.1']
    #allocation4 [shape = 's32[1]{0}', space=sflag, size = 0x4, scoped, tag = 'scoped memory for tpu_custom_call.1']
    #allocation5 [shape = 'u8[16384]{0}', space=vmem, size = 0x4000, scoped, tag = 'input window, operand 1, single buffered']
    #allocation6 [shape = 's32[1]{0}', space=sflag, size = 0x4, scoped, tag = 'scoped memory for tpu_custom_call.1']
    #allocation7 [shape = 'u8[65536]{0}', space=vmem, size = 0x10000, scoped, tag = 'input window, operand 3, single buffered']
    #allocation8 [shape = 'u8[4096]{0}', space=vmem, size = 0x1000, scoped, tag = 'output window, operand 0, single buffered']
    %10 = vsyncpa [#allocation3], 0
    %11 = vsyncpa [#allocation6], 0
    %12 = vsyncpa [#allocation4], 0
    // Predicated region
    $region2: #{tpu_custom_call.1} parent=1 // pred_check
      _
    $region3: #{tpu_custom_call.1} parent=1 // pred_check_branch
      %14 = sbr.rel (0) target = $region5
    $region4: #{tpu_custom_call.1} parent=1 // pred_region
      %s16 = ssub.s32 128, 128
      %17 = vsyncadd [#allocation3], %s16
      %s19 = sshll.u32 [#allocation2], 4
      %s20 = int_to_ptr.vmem [resolvable:$true] %s19
      %22 = dma.hbm_to_vmem [thread:$0]  %s0, 128, %s20, [#allocation3]
    $region5: #{tpu_custom_call.1} parent=1 // pred_fallthru
      _
    // Predicated region
    $region6: #{tpu_custom_call.1} parent=1 // pred_check
      _
    $region7: #{tpu_custom_call.1} parent=1 // pred_check_branch
      %24 = sbr.rel (0) target = $region9
    $region8: #{tpu_custom_call.1} parent=1 // pred_region
      %s26 = ssub.s32 512, 512
      %27 = vsyncadd [#allocation6], %s26
      %s28 = sshll.u32 [#allocation5], 4
      %s29 = int_to_ptr.vmem [resolvable:$true] %s28
      %34 = dma.hbm_to_vmem [thread:$0]  %s1, 512, %s29, [#allocation6], 128, 128, 8
    $region9: #{tpu_custom_call.1} parent=1 // pred_fallthru
      _
    // Predicated region
    $region10: #{tpu_custom_call.1} parent=1 // pred_check
      _
    $region11: #{tpu_custom_call.1} parent=1 // pred_check_branch
      %36 = sbr.rel (0) target = $region13
    $region12: #{tpu_custom_call.1} parent=1 // pred_region
      _
    $region13: #{tpu_custom_call.1} parent=1 // pred_fallthru
      _
    // Predicated region
    $region14: #{tpu_custom_call.1} parent=1 // pred_check
      _
    $region15: #{tpu_custom_call.1} parent=1 // pred_check_branch
      %38 = sbr.rel (0) target = $region17
    $region16: #{tpu_custom_call.1} parent=1 // pred_region
      %s40 = ssub.s32 2048, 2048
      %41 = vsyncadd [#allocation6], %s40
      %s42 = sshll.u32 [#allocation7], 4
      %s43 = int_to_ptr.vmem [resolvable:$true] %s42
      %48 = dma.hbm_to_vmem [thread:$0]  %s3, 2048, %s43, [#allocation6], 128, 128, 8
    $region17: #{tpu_custom_call.1} parent=1 // pred_fallthru
      _
    // Predicated region
    $region18: #{tpu_custom_call.1} parent=1 // pred_check
      _
    $region19: #{tpu_custom_call.1} parent=1 // pred_check_branch
      %50 = sbr.rel (0) target = $region21
    $region20: #{tpu_custom_call.1} parent=1 // pred_region
      _
    $region21: #{tpu_custom_call.1} parent=1 // pred_fallthru
      _
    // Predicated region
    $region22: #{tpu_custom_call.1} parent=1 // pred_check
      _
    $region23: #{tpu_custom_call.1} parent=1 // pred_check_branch
      %52 = sbr.rel (0) target = $region25
    $region24: #{tpu_custom_call.1} parent=1 // pred_region
      %53 = dma.done [#allocation3], 128
    $region25: #{tpu_custom_call.1} parent=1 // pred_fallthru
      _
    // Predicated region
    $region26: #{tpu_custom_call.1} parent=1 // pred_check
      _
    $region27: #{tpu_custom_call.1} parent=1 // pred_check_branch
      %55 = sbr.rel (0) target = $region29
    $region28: #{tpu_custom_call.1} parent=1 // pred_region
      %56 = dma.done [#allocation6], 512
    $region29: #{tpu_custom_call.1} parent=1 // pred_fallthru
      _
    // Predicated region
    $region30: #{tpu_custom_call.1} parent=1 // pred_check
      _
    $region31: #{tpu_custom_call.1} parent=1 // pred_check_branch
      %58 = sbr.rel (0) target = $region33
    $region32: #{tpu_custom_call.1} parent=1 // pred_region
      %59 = dma.done [#allocation6], 2048
    $region33: #{tpu_custom_call.1} parent=1 // pred_fallthru
      _
    %v60 = vld [vmem:[#allocation2] sm:$0xff]
    %v61 = vld [vmem:[#allocation5] sm:$0xff]
    %v62 = vld [vmem:[#allocation5 + $0x8] sm:$0xff]
    %v63 = vld [vmem:[#allocation5 + $0x10] sm:$0xff]
    %v64 = vld [vmem:[#allocation5 + $0x18] sm:$0xff]
    %v65 = vld [vmem:[%s2] sm:$0x1]
    %v67 = vlaneseq
    %v68 = vshrl.u32 %v67, 7
    %v69 = vsub.s32 0, %v68
    %v70 = vrot.slane %v65, %v69
    %vm72 = vcmask 261120
    %v74 = vsel %vm72, %v60, 0
    %76 = vmatprep.subr.mxu0 0.0
    %77 = vmatpush1.msra.mxu0 0.0
    %78 = vmatprep.subr.mxu0 0.0
    %79 = vmatpush1.msra.mxu0 0.0
    %80 = vmatprep.subr.mxu0 0.0
    %81 = vmatpush1.msra.mxu0 0.0
    %82 = vmatprep.subr.mxu0 0.0
    %83 = vmatpush1.msra.mxu0 0.0
    %84 = vmatprep.subr.mxu0 0.0
    %85 = vmatpush1.msra.mxu0 0.0
    %86 = vmatprep.subr.mxu0 0.0
    %87 = vmatpush1.msra.mxu0 0.0
    %88 = vmatprep.subr.mxu0 0.0
    %89 = vmatpush1.msra.mxu0 0.0
    %90 = vmatprep.subr.mxu0 0.0
    %91 = vmatpush1.msra.mxu0 0.0
    %92 = vmatprep.subr.mxu0 0.0
    %93 = vmatpush1.msra.mxu0 0.0
    %94 = vmatprep.subr.mxu0 0.0
    %95 = vmatpush1.msra.mxu0 0.0
    %96 = vmatprep.subr.mxu0 0.0
    %97 = vmatpush1.msra.mxu0 0.0
    %98 = vmatprep.subr.mxu0 0.0
    %99 = vmatpush1.msra.mxu0 0.0
    %100 = vmatprep.subr.mxu0 0.0
    %101 = vmatpush1.msra.mxu0 %v64
    %102 = vmatprep.subr.mxu0 0.0
    %103 = vmatpush1.msra.mxu0 %v63
    %104 = vmatprep.subr.mxu0 0.0
    %105 = vmatpush1.msra.mxu0 %v62
    %106 = vmatprep.subr.mxu0 0.0
    %107 = vmatpush1.msra.mxu0 %v61
    %108 = vmatprep.subr.mxu0 0.0
    %109 = vmatpush2.msra.mxu0 0.0
    %110 = vmatprep.subr.mxu0 0.0
    %111 = vmatpush2.msra.mxu0 0.0
    %112 = vmatprep.subr.mxu0 0.0
    %113 = vmatpush2.msra.mxu0 0.0
    %114 = vmatprep.subr.mxu0 0.0
    %115 = vmatpush2.msra.mxu0 0.0
    %116 = vmatprep.subr.mxu0 0.0
    %117 = vmatpush2.msra.mxu0 0.0
    %118 = vmatprep.subr.mxu0 0.0
    %119 = vmatpush2.msra.mxu0 0.0
    %120 = vmatprep.subr.mxu0 0.0
    %121 = vmatpush2.msra.mxu0 0.0
    %122 = vmatprep.subr.mxu0 0.0
    %123 = vmatpush2.msra.mxu0 0.0
    %124 = vmatprep.subr.mxu0 0.0
    %125 = vmatpush2.msra.mxu0 0.0
    %126 = vmatprep.subr.mxu0 0.0
    %127 = vmatpush2.msra.mxu0 0.0
    %128 = vmatprep.subr.mxu0 0.0
    %129 = vmatpush2.msra.mxu0 0.0
    %130 = vmatprep.subr.mxu0 0.0
    %131 = vmatpush2.msra.mxu0 0.0
    %132 = vmatprep.subr.mxu0 0.0
    %133 = vmatpush2.msra.mxu0 0.0
    %134 = vmatprep.subr.mxu0 0.0
    %135 = vmatpush2.msra.mxu0 0.0
    %136 = vmatprep.subr.mxu0 0.0
    %137 = vmatpush2.msra.mxu0 0.0
    %138 = vmatprep.subr.mxu0 0.0
    %139 = vmatpush2.msra.mxu0 0.0
    %140 = vmatprep.mubr.f32.mxu0 0.0
    %141 = vmatmul.mubr.f32.gmra.mxu0 %v74
    %v142 = vpop.f32.mrf.mxu0
    %v143 = vadd.f32 %v70, %v142
    %v144 = vpop.f32.mrf.mxu0
    %145 = vdwg.mxu0
    %v146 = vmax.f32 %v143, 0.0
    %v147 = vld [vmem:[#allocation7] sm:$0xff]
    %v148 = vld [vmem:[#allocation7 + $0x8] sm:$0xff]
    %v149 = vld [vmem:[#allocation7 + $0x10] sm:$0xff]
    %v150 = vld [vmem:[#allocation7 + $0x18] sm:$0xff]
    %v151 = vld [vmem:[#allocation7 + $0x20] sm:$0xff]
    %v152 = vld [vmem:[#allocation7 + $0x28] sm:$0xff]
    %v153 = vld [vmem:[#allocation7 + $0x30] sm:$0xff]
    %v154 = vld [vmem:[#allocation7 + $0x38] sm:$0xff]
    %v155 = vld [vmem:[#allocation7 + $0x40] sm:$0xff]
    %v156 = vld [vmem:[#allocation7 + $0x48] sm:$0xff]
    %v157 = vld [vmem:[#allocation7 + $0x50] sm:$0xff]
    %v158 = vld [vmem:[#allocation7 + $0x58] sm:$0xff]
    %v159 = vld [vmem:[#allocation7 + $0x60] sm:$0xff]
    %v160 = vld [vmem:[#allocation7 + $0x68] sm:$0xff]
    %v161 = vld [vmem:[#allocation7 + $0x70] sm:$0xff]
    %v162 = vld [vmem:[#allocation7 + $0x78] sm:$0xff]
    %v163 = vld [vmem:[%s4] sm:$0x1]
    %v165 = vlaneseq
    %v166 = vshrl.u32 %v165, 7
    %v167 = vsub.s32 0, %v166
    %v168 = vrot.slane %v163, %v167
    %170 = vmatprep.subr.mxu0 0.0
    %171 = vmatpush1.msra.mxu0 %v162
    %172 = vmatprep.subr.mxu0 0.0
    %173 = vmatpush1.msra.mxu0 %v161
    %174 = vmatprep.subr.mxu0 0.0
    %175 = vmatpush1.msra.mxu0 %v160
    %176 = vmatprep.subr.mxu0 0.0
    %177 = vmatpush1.msra.mxu0 %v159
    %178 = vmatprep.subr.mxu0 0.0
    %179 = vmatpush1.msra.mxu0 %v158
    %180 = vmatprep.subr.mxu0 0.0
    %181 = vmatpush1.msra.mxu0 %v157
    %182 = vmatprep.subr.mxu0 0.0
    %183 = vmatpush1.msra.mxu0 %v156
    %184 = vmatprep.subr.mxu0 0.0
    %185 = vmatpush1.msra.mxu0 %v155
    %186 = vmatprep.subr.mxu0 0.0
    %187 = vmatpush1.msra.mxu0 %v154
    %188 = vmatprep.subr.mxu0 0.0
    %189 = vmatpush1.msra.mxu0 %v153
    %190 = vmatprep.subr.mxu0 0.0
    %191 = vmatpush1.msra.mxu0 %v152
    %192 = vmatprep.subr.mxu0 0.0
    %193 = vmatpush1.msra.mxu0 %v151
    %194 = vmatprep.subr.mxu0 0.0
    %195 = vmatpush1.msra.mxu0 %v150
    %196 = vmatprep.subr.mxu0 0.0
    %197 = vmatpush1.msra.mxu0 %v149
    %198 = vmatprep.subr.mxu0 0.0
    %199 = vmatpush1.msra.mxu0 %v148
    %200 = vmatprep.subr.mxu0 0.0
    %201 = vmatpush1.msra.mxu0 %v147
    %202 = vmatprep.subr.mxu0 0.0
    %203 = vmatpush2.msra.mxu0 0.0
    %204 = vmatprep.subr.mxu0 0.0
    %205 = vmatpush2.msra.mxu0 0.0
    %206 = vmatprep.subr.mxu0 0.0
    %207 = vmatpush2.msra.mxu0 0.0
    %208 = vmatprep.subr.mxu0 0.0
    %209 = vmatpush2.msra.mxu0 0.0
    %210 = vmatprep.subr.mxu0 0.0
    %211 = vmatpush2.msra.mxu0 0.0
    %212 = vmatprep.subr.mxu0 0.0
    %213 = vmatpush2.msra.mxu0 0.0
    %214 = vmatprep.subr.mxu0 0.0
    %215 = vmatpush2.msra.mxu0 0.0
    %216 = vmatprep.subr.mxu0 0.0
    %217 = vmatpush2.msra.mxu0 0.0
    %218 = vmatprep.subr.mxu0 0.0
    %219 = vmatpush2.msra.mxu0 0.0
    %220 = vmatprep.subr.mxu0 0.0
    %221 = vmatpush2.msra.mxu0 0.0
    %222 = vmatprep.subr.mxu0 0.0
    %223 = vmatpush2.msra.mxu0 0.0
    %224 = vmatprep.subr.mxu0 0.0
    %225 = vmatpush2.msra.mxu0 0.0
    %226 = vmatprep.subr.mxu0 0.0
    %227 = vmatpush2.msra.mxu0 0.0
    %228 = vmatprep.subr.mxu0 0.0
    %229 = vmatpush2.msra.mxu0 0.0
    %230 = vmatprep.subr.mxu0 0.0
    %231 = vmatpush2.msra.mxu0 0.0
    %232 = vmatprep.subr.mxu0 0.0
    %233 = vmatpush2.msra.mxu0 0.0
    %234 = vmatprep.mubr.f32.mxu0 0.0
    %235 = vmatmul.mubr.f32.gmra.mxu0 %v146
    %v236 = vpop.f32.mrf.mxu0
    %v237 = vadd.f32 %v168, %v236
    %v238 = vpop.f32.mrf.mxu0
    %239 = vdwg.mxu0
    %240 = vst [vmem:[#allocation8] sm:$0xff] %v237
    // Predicated region
    $region34: #{tpu_custom_call.1} parent=1 // pred_check
      _
    $region35: #{tpu_custom_call.1} parent=1 // pred_check_branch
      %242 = sbr.rel (0) target = $region37
    $region36: #{tpu_custom_call.1} parent=1 // pred_region
      %s244 = ssub.s32 128, 128
      %245 = vsyncadd [#allocation4], %s244
      %s247 = sshll.u32 [#allocation8], 4
      %s248 = int_to_ptr.vmem [resolvable:$true] %s247
      %250 = dma.vmem_to_hbm [thread:$0]  %s248, 128, %s5, [#allocation4]
    $region37: #{tpu_custom_call.1} parent=1 // pred_fallthru
      _
    // Predicated region
    $region38: #{tpu_custom_call.1} parent=1 // pred_check
      _
    $region39: #{tpu_custom_call.1} parent=1 // pred_check_branch
      %252 = sbr.rel (0) target = $region41
    $region40: #{tpu_custom_call.1} parent=1 // pred_region
      %253 = dma.done [#allocation4], 128
    $region41: #{tpu_custom_call.1} parent=1 // pred_fallthru
      _
    %254 = vsyncpa [#allocation3], 1
    %255 = vsyncpa [#allocation6], 1
    %256 = vsyncpa [#allocation4], 1

// kernel: tpu_custom_call.1
$region0: #{tpu_custom_call.1}
  #allocation0 [shape = 'u32[]', space=smem, size = 0x4, offset = 0x4, fixed_abs, tag = 'smem constant byte address 0x4 - core index']
  #allocation1 [shape = 'u32[144,128]{1,0:T(1,128)}', space=vmem, size = 0x12000, scoped, tag = 'internal scratch']
  %s0 = inlined_call_operand.hbm [shape: f32[8,32], index: 0, kind: input, shape index: {}]
  %s1 = inlined_call_operand.hbm [shape: f32[32,128], index: 1, kind: input, shape index: {}]
  %s2 = inlined_call_operand.vmem [shape: f32[1,128], index: 2, kind: input, shape index: {}]
  %s3 = inlined_call_operand.hbm [shape: f32[128,128], index: 3, kind: input, shape index: {}]
  %s4 = inlined_call_operand.vmem [shape: f32[1,128], index: 4, kind: input, shape index: {}]
  %s5 = inlined_call_operand.hbm [shape: f32[8,128], index: 5, kind: output, shape index: {}]
  %s6 = sld [smem:[#allocation0]]
  $region42: #{tpu_custom_call.1} parent=0
    _
  %s8 = ssub.s32 1, %s6
  %s9 = scalar_select 0, %s8, %s6
  $region1: #{tpu_custom_call.1} parent=0
    #allocation2 [shape = 'u8[4096]{0}', space=vmem, size = 0x1000, scoped, tag = 'input window, operand 0, single buffered']
    #allocation3 [shape = 's32[1]{0}', space=sflag, size = 0x4, scoped, tag = 'scoped memory for tpu_custom_call.1']
    #allocation4 [shape = 's32[1]{0}', space=sflag, size = 0x4, scoped, tag = 'scoped memory for tpu_custom_call.1']
    #allocation5 [shape = 'u8[16384]{0}', space=vmem, size = 0x4000, scoped, tag = 'input window, operand 1, single buffered']
    #allocation6 [shape = 's32[1]{0}', space=sflag, size = 0x4, scoped, tag = 'scoped memory for tpu_custom_call.1']
    #allocation7 [shape = 'u8[65536]{0}', space=vmem, size = 0x10000, scoped, tag = 'input window, operand 3, single buffered']
    #allocation8 [shape = 'u8[4096]{0}', space=vmem, size = 0x1000, scoped, tag = 'output window, operand 0, single buffered']
    %10 = vsyncpa [#allocation3], 0
    %11 = vsyncpa [#allocation6], 0
    %12 = vsyncpa [#allocation4], 0
    // Predicated region
    $region2: #{tpu_custom_call.1} parent=1 // pred_check
      _
    $region3: #{tpu_custom_call.1} parent=1 // pred_check_branch
      %14 = sbr.rel (0) target = $region5
    $region4: #{tpu_custom_call.1} parent=1 // pred_region
      %s16 = ssub.s32 128, 128
      %17 = vsyncadd [#allocation3], %s16
      %s19 = sshll.u32 [#allocation2], 4
      %s20 = int_to_ptr.vmem [resolvable:$true] %s19
      %22 = dma.hbm_to_vmem [thread:$0]  %s0, 128, %s20, [#allocation3]
    $region5: #{tpu_custom_call.1} parent=1 // pred_fallthru
      _
    // Predicated region
    $region6: #{tpu_custom_call.1} parent=1 // pred_check
      _
    $region7: #{tpu_custom_call.1} parent=1 // pred_check_branch
      %24 = sbr.rel (0) target = $region9
    $region8: #{tpu_custom_call.1} parent=1 // pred_region
      %s26 = ssub.s32 512, 512
      %27 = vsyncadd [#allocation6], %s26
      %s28 = sshll.u32 [#allocation5], 4
      %s29 = int_to_ptr.vmem [resolvable:$true] %s28
      %34 = dma.hbm_to_vmem [thread:$0]  %s1, 512, %s29, [#allocation6], 128, 128, 8
    $region9: #{tpu_custom_call.1} parent=1 // pred_fallthru
      _
    // Predicated region
    $region10: #{tpu_custom_call.1} parent=1 // pred_check
      _
    $region11: #{tpu_custom_call.1} parent=1 // pred_check_branch
      %36 = sbr.rel (0) target = $region13
    $region12: #{tpu_custom_call.1} parent=1 // pred_region
      _
    $region13: #{tpu_custom_call.1} parent=1 // pred_fallthru
      _
    // Predicated region
    $region14: #{tpu_custom_call.1} parent=1 // pred_check
      _
    $region15: #{tpu_custom_call.1} parent=1 // pred_check_branch
      %38 = sbr.rel (0) target = $region17
    $region16: #{tpu_custom_call.1} parent=1 // pred_region
      %s40 = ssub.s32 2048, 2048
      %41 = vsyncadd [#allocation6], %s40
      %s42 = sshll.u32 [#allocation7], 4
      %s43 = int_to_ptr.vmem [resolvable:$true] %s42
      %48 = dma.hbm_to_vmem [thread:$0]  %s3, 2048, %s43, [#allocation6], 128, 128, 8
    $region17: #{tpu_custom_call.1} parent=1 // pred_fallthru
      _
    // Predicated region
    $region18: #{tpu_custom_call.1} parent=1 // pred_check
      _
    $region19: #{tpu_custom_call.1} parent=1 // pred_check_branch
      %50 = sbr.rel (0) target = $region21
    $region20: #{tpu_custom_call.1} parent=1 // pred_region
      _
    $region21: #{tpu_custom_call.1} parent=1 // pred_fallthru
      _
    // Predicated region
    $region22: #{tpu_custom_call.1} parent=1 // pred_check
      _
    $region23: #{tpu_custom_call.1} parent=1 // pred_check_branch
      %52 = sbr.rel (0) target = $region25
    $region24: #{tpu_custom_call.1} parent=1 // pred_region
      %53 = dma.done [#allocation3], 128
    $region25: #{tpu_custom_call.1} parent=1 // pred_fallthru
      _
    // Predicated region
    $region26: #{tpu_custom_call.1} parent=1 // pred_check
      _
    $region27: #{tpu_custom_call.1} parent=1 // pred_check_branch
      %55 = sbr.rel (0) target = $region29
    $region28: #{tpu_custom_call.1} parent=1 // pred_region
      %56 = dma.done [#allocation6], 512
    $region29: #{tpu_custom_call.1} parent=1 // pred_fallthru
      _
    // Predicated region
    $region30: #{tpu_custom_call.1} parent=1 // pred_check
      _
    $region31: #{tpu_custom_call.1} parent=1 // pred_check_branch
      %58 = sbr.rel (0) target = $region33
    $region32: #{tpu_custom_call.1} parent=1 // pred_region
      %59 = dma.done [#allocation6], 2048
    $region33: #{tpu_custom_call.1} parent=1 // pred_fallthru
      _
    %v60 = vld [vmem:[#allocation2] sm:$0xff]
    %v61 = vld [vmem:[#allocation5] sm:$0xff]
    %v62 = vld [vmem:[#allocation5 + $0x8] sm:$0xff]
    %v63 = vld [vmem:[#allocation5 + $0x10] sm:$0xff]
    %v64 = vld [vmem:[#allocation5 + $0x18] sm:$0xff]
    %v65 = vld [vmem:[%s2] sm:$0x1]
    %v67 = vlaneseq
    %v68 = vshrl.u32 %v67, 7
    %v69 = vsub.s32 0, %v68
    %v70 = vrot.slane %v65, %v69
    %vm72 = vcmask 261120
    %v74 = vsel %vm72, %v60, 0
    %76 = vmatprep.subr.mxu0 0.0
    %77 = vmatpush1.msra.mxu0 0.0
    %78 = vmatprep.subr.mxu0 0.0
    %79 = vmatpush1.msra.mxu0 0.0
    %80 = vmatprep.subr.mxu0 0.0
    %81 = vmatpush1.msra.mxu0 0.0
    %82 = vmatprep.subr.mxu0 0.0
    %83 = vmatpush1.msra.mxu0 0.0
    %84 = vmatprep.subr.mxu0 0.0
    %85 = vmatpush1.msra.mxu0 0.0
    %86 = vmatprep.subr.mxu0 0.0
    %87 = vmatpush1.msra.mxu0 0.0
    %88 = vmatprep.subr.mxu0 0.0
    %89 = vmatpush1.msra.mxu0 0.0
    %90 = vmatprep.subr.mxu0 0.0
    %91 = vmatpush1.msra.mxu0 0.0
    %92 = vmatprep.subr.mxu0 0.0
    %93 = vmatpush1.msra.mxu0 0.0
    %94 = vmatprep.subr.mxu0 0.0
    %95 = vmatpush1.msra.mxu0 0.0
    %96 = vmatprep.subr.mxu0 0.0
    %97 = vmatpush1.msra.mxu0 0.0
    %98 = vmatprep.subr.mxu0 0.0
    %99 = vmatpush1.msra.mxu0 0.0
    %100 = vmatprep.subr.mxu0 0.0
    %101 = vmatpush1.msra.mxu0 %v64
    %102 = vmatprep.subr.mxu0 0.0
    %103 = vmatpush1.msra.mxu0 %v63
    %104 = vmatprep.subr.mxu0 0.0
    %105 = vmatpush1.msra.mxu0 %v62
    %106 = vmatprep.subr.mxu0 0.0
    %107 = vmatpush1.msra.mxu0 %v61
    %108 = vmatprep.subr.mxu0 0.0
    %109 = vmatpush2.msra.mxu0 0.0
    %110 = vmatprep.subr.mxu0 0.0
    %111 = vmatpush2.msra.mxu0 0.0
    %112 = vmatprep.subr.mxu0 0.0
    %113 = vmatpush2.msra.mxu0 0.0
    %114 = vmatprep.subr.mxu0 0.0
    %115 = vmatpush2.msra.mxu0 0.0
    %116 = vmatprep.subr.mxu0 0.0
    %117 = vmatpush2.msra.mxu0 0.0
    %118 = vmatprep.subr.mxu0 0.0
    %119 = vmatpush2.msra.mxu0 0.0
    %120 = vmatprep.subr.mxu0 0.0
    %121 = vmatpush2.msra.mxu0 0.0
    %122 = vmatprep.subr.mxu0 0.0
    %123 = vmatpush2.msra.mxu0 0.0
    %124 = vmatprep.subr.mxu0 0.0
    %125 = vmatpush2.msra.mxu0 0.0
    %126 = vmatprep.subr.mxu0 0.0
    %127 = vmatpush2.msra.mxu0 0.0
    %128 = vmatprep.subr.mxu0 0.0
    %129 = vmatpush2.msra.mxu0 0.0
    %130 = vmatprep.subr.mxu0 0.0
    %131 = vmatpush2.msra.mxu0 0.0
    %132 = vmatprep.subr.mxu0 0.0
    %133 = vmatpush2.msra.mxu0 0.0
    %134 = vmatprep.subr.mxu0 0.0
    %135 = vmatpush2.msra.mxu0 0.0
    %136 = vmatprep.subr.mxu0 0.0
    %137 = vmatpush2.msra.mxu0 0.0
    %138 = vmatprep.subr.mxu0 0.0
    %139 = vmatpush2.msra.mxu0 0.0
    %140 = vmatprep.mubr.f32.mxu0 0.0
    %141 = vmatmul.mubr.f32.gmra.mxu0 %v74
    %v142 = vpop.f32.mrf.mxu0
    %v143 = vadd.f32 %v70, %v142
    %v144 = vpop.f32.mrf.mxu0
    %145 = vdwg.mxu0
    %v146 = vmax.f32 %v143, 0.0
    %v147 = vld [vmem:[#allocation7] sm:$0xff]
    %v148 = vld [vmem:[#allocation7 + $0x8] sm:$0xff]
    %v149 = vld [vmem:[#allocation7 + $0x10] sm:$0xff]
    %v150 = vld [vmem:[#allocation7 + $0x18] sm:$0xff]
    %v151 = vld [vmem:[#allocation7 + $0x20] sm:$0xff]
    %v152 = vld [vmem:[#allocation7 + $0x28] sm:$0xff]
    %v153 = vld [vmem:[#allocation7 + $0x30] sm:$0xff]
    %v154 = vld [vmem:[#allocation7 + $0x38] sm:$0xff]
    %v155 = vld [vmem:[#allocation7 + $0x40] sm:$0xff]
    %v156 = vld [vmem:[#allocation7 + $0x48] sm:$0xff]
    %v157 = vld [vmem:[#allocation7 + $0x50] sm:$0xff]
    %v158 = vld [vmem:[#allocation7 + $0x58] sm:$0xff]
    %v159 = vld [vmem:[#allocation7 + $0x60] sm:$0xff]
    %v160 = vld [vmem:[#allocation7 + $0x68] sm:$0xff]
    %v161 = vld [vmem:[#allocation7 + $0x70] sm:$0xff]
    %v162 = vld [vmem:[#allocation7 + $0x78] sm:$0xff]
    %v163 = vld [vmem:[%s4] sm:$0x1]
    %v165 = vlaneseq
    %v166 = vshrl.u32 %v165, 7
    %v167 = vsub.s32 0, %v166
    %v168 = vrot.slane %v163, %v167
    %170 = vmatprep.subr.mxu0 0.0
    %171 = vmatpush1.msra.mxu0 %v162
    %172 = vmatprep.subr.mxu0 0.0
    %173 = vmatpush1.msra.mxu0 %v161
    %174 = vmatprep.subr.mxu0 0.0
    %175 = vmatpush1.msra.mxu0 %v160
    %176 = vmatprep.subr.mxu0 0.0
    %177 = vmatpush1.msra.mxu0 %v159
    %178 = vmatprep.subr.mxu0 0.0
    %179 = vmatpush1.msra.mxu0 %v158
    %180 = vmatprep.subr.mxu0 0.0
    %181 = vmatpush1.msra.mxu0 %v157
    %182 = vmatprep.subr.mxu0 0.0
    %183 = vmatpush1.msra.mxu0 %v156
    %184 = vmatprep.subr.mxu0 0.0
    %185 = vmatpush1.msra.mxu0 %v155
    %186 = vmatprep.subr.mxu0 0.0
    %187 = vmatpush1.msra.mxu0 %v154
    %188 = vmatprep.subr.mxu0 0.0
    %189 = vmatpush1.msra.mxu0 %v153
    %190 = vmatprep.subr.mxu0 0.0
    %191 = vmatpush1.msra.mxu0 %v152
    %192 = vmatprep.subr.mxu0 0.0
    %193 = vmatpush1.msra.mxu0 %v151
    %194 = vmatprep.subr.mxu0 0.0
    %195 = vmatpush1.msra.mxu0 %v150
    %196 = vmatprep.subr.mxu0 0.0
    %197 = vmatpush1.msra.mxu0 %v149
    %198 = vmatprep.subr.mxu0 0.0
    %199 = vmatpush1.msra.mxu0 %v148
    %200 = vmatprep.subr.mxu0 0.0
    %201 = vmatpush1.msra.mxu0 %v147
    %202 = vmatprep.subr.mxu0 0.0
    %203 = vmatpush2.msra.mxu0 0.0
    %204 = vmatprep.subr.mxu0 0.0
    %205 = vmatpush2.msra.mxu0 0.0
    %206 = vmatprep.subr.mxu0 0.0
    %207 = vmatpush2.msra.mxu0 0.0
    %208 = vmatprep.subr.mxu0 0.0
    %209 = vmatpush2.msra.mxu0 0.0
    %210 = vmatprep.subr.mxu0 0.0
    %211 = vmatpush2.msra.mxu0 0.0
    %212 = vmatprep.subr.mxu0 0.0
    %213 = vmatpush2.msra.mxu0 0.0
    %214 = vmatprep.subr.mxu0 0.0
    %215 = vmatpush2.msra.mxu0 0.0
    %216 = vmatprep.subr.mxu0 0.0
    %217 = vmatpush2.msra.mxu0 0.0
    %218 = vmatprep.subr.mxu0 0.0
    %219 = vmatpush2.msra.mxu0 0.0
    %220 = vmatprep.subr.mxu0 0.0
    %221 = vmatpush2.msra.mxu0 0.0
    %222 = vmatprep.subr.mxu0 0.0
    %223 = vmatpush2.msra.mxu0 0.0
    %224 = vmatprep.subr.mxu0 0.0
    %225 = vmatpush2.msra.mxu0 0.0
    %226 = vmatprep.subr.mxu0 0.0
    %227 = vmatpush2.msra.mxu0 0.0
    %228 = vmatprep.subr.mxu0 0.0
    %229 = vmatpush2.msra.mxu0 0.0
    %230 = vmatprep.subr.mxu0 0.0
    %231 = vmatpush2.msra.mxu0 0.0
    %232 = vmatprep.subr.mxu0 0.0
    %233 = vmatpush2.msra.mxu0 0.0
    %234 = vmatprep.mubr.f32.mxu0 0.0
    %235 = vmatmul.mubr.f32.gmra.mxu0 %v146
    %v236 = vpop.f32.mrf.mxu0
    %v237 = vadd.f32 %v168, %v236
    %v238 = vpop.f32.mrf.mxu0
    %239 = vdwg.mxu0
    %240 = vst [vmem:[#allocation8] sm:$0xff] %v237
    // Predicated region
    $region34: #{tpu_custom_call.1} parent=1 // pred_check
      _
    $region35: #{tpu_custom_call.1} parent=1 // pred_check_branch
      %242 = sbr.rel (0) target = $region37
    $region36: #{tpu_custom_call.1} parent=1 // pred_region
      %s244 = ssub.s32 128, 128
      %245 = vsyncadd [#allocation4], %s244
      %s247 = sshll.u32 [#allocation8], 4
      %s248 = int_to_ptr.vmem [resolvable:$true] %s247
      %250 = dma.vmem_to_hbm [thread:$0]  %s248, 128, %s5, [#allocation4]
    $region37: #{tpu_custom_call.1} parent=1 // pred_fallthru
      _
    // Predicated region
    $region38: #{tpu_custom_call.1} parent=1 // pred_check
      _
    $region39: #{tpu_custom_call.1} parent=1 // pred_check_branch
      %252 = sbr.rel (0) target = $region41
    $region40: #{tpu_custom_call.1} parent=1 // pred_region
      %253 = dma.done [#allocation4], 128
    $region41: #{tpu_custom_call.1} parent=1 // pred_fallthru
      _
    %254 = vsyncpa [#allocation3], 1
    %255 = vsyncpa [#allocation6], 1
    %256 = vsyncpa [#allocation4], 1

</llo_original>
